<compile_context>
chip_gen: v6e
topology: v6e:2x2x1
jax: 0.10.0
libtpu: 0.0.40
codegen_flags: <defaults>
</compile_context>

<pallas_src>
import functools

import jax
import jax.numpy as jnp
from jax import lax
from jax.experimental import pallas as pl
from jax.experimental.pallas import tpu as pltpu


# ---------------------------------------------------------------------------
# Per-generation sizing helpers
# ---------------------------------------------------------------------------
def _vmem_budgets():
    """Returns (tile_budget_bytes, tq_cap, vmem_limit_cap_bytes)."""
    try:
        cap = int(pltpu.get_tpu_info().vmem_capacity_bytes)
    except Exception:
        cap = 64 * 1024 * 1024            # be conservative (v7x-sized VMEM)
    if cap >= 100 * 1024 * 1024:          # v5e / v6e: 128 MiB VMEM
        return 64 << 20, 512, 100 << 20
    return 16 << 20, 128, 48 << 20        # v7x: 64 MiB VMEM per TensorCore


def _choose_tq(seq, per_row_bytes, budget_bytes, tq_cap):
    """Token-tile size: multiple of 8, <= tq_cap, footprint under budget."""
    tq = budget_bytes // max(1, per_row_bytes)
    tq = max(8, min(tq_cap, (tq // 8) * 8))
    seq_cap = max(8, (seq // 8) * 8)      # no point tiling far past the sequence
    return int(max(8, min(tq, seq_cap)))


# ---------------------------------------------------------------------------
# Fast path: word table resident in VMEM; gather = exact one-hot MXU matmul.
# ---------------------------------------------------------------------------
def _pos_emb_vmem_kernel(ids_ref, word_ref, pos_ref, out_ref):
    """ids_ref: (tq,1) i32, word_ref: (vocab,E) resident, pos/out: (tq,E)."""
    vocab = word_ref.shape[0]
    tq = ids_ref.shape[0]
    ids = jnp.clip(ids_ref[...], 0, vocab - 1)                    # (tq, 1)
    one_hot = ids == lax.broadcasted_iota(jnp.int32, (tq, vocab), 1)
    # Exact gather: each output row is 1.0 * one table row (f32 accumulate).
    gathered = jnp.dot(one_hot.astype(word_ref.dtype), word_ref[...],
                       preferred_element_type=jnp.float32)        # (tq, E)
    out_ref[...] = (gathered
                    + pos_ref[...].astype(jnp.float32)).astype(out_ref.dtype)


# ---------------------------------------------------------------------------
# Fallback: table stays in HBM; double-buffered per-row DMA gather.
# ---------------------------------------------------------------------------
def _pos_emb_dma_kernel(ids_ref, word_hbm, pos_ref, out_ref, gbuf, sem, *,
                        tq, compute_dtype):
    """One grid step = tq consecutive sequence positions.

    ids_ref : (num_tiles*tq,) int32 in SMEM (scalar prefetch), pre-clamped.
    word_hbm: (vocab, E) word table left in HBM (pl.ANY).
    pos_ref : (tq, E) positional tile (auto-pipelined).
    out_ref : (tq, E) output tile (auto-pipelined).
    gbuf    : (2, tq, E) VMEM gather scratch, double-buffered.
    sem     : (2,) DMA semaphores, one per gather slot.
    """
    i = pl.program_id(0)
    nsteps = pl.num_programs(0)
    cur = i % 2

    def issue_tile(step, slot):
        base = step * tq
        # Issue all tq row DMAs back-to-back so they overlap each other.
        @pl.loop(0, tq)
        def _issue(r):
            tok = ids_ref[base + r]
            pltpu.make_async_copy(
                word_hbm.at[pl.ds(tok, 1), :],
                gbuf.at[slot, pl.ds(r, 1), :],
                sem.at[slot],
            ).start()

    # Prime slot 0 with the first tile's rows.
    @pl.when(i == 0)
    def _prime():
        issue_tile(0, 0)

    # Prefetch the NEXT tile's rows into the other slot before waiting on the
    # current one, so those DMAs run behind this step's add + writeback instead
    # of being exposed every step.
    @pl.when(i + 1 < nsteps)
    def _prefetch():
        issue_tile(i + 1, 1 - cur)

    # Single wait covering all tq row copies of the current slot
    # (DMA semaphores count bytes: tq (1,E) rows == one (tq,E) wait).
    pltpu.make_async_copy(gbuf.at[cur], gbuf.at[cur], sem.at[cur]).wait()

    out_ref[...] = (
        gbuf[cur].astype(compute_dtype) + pos_ref[...].astype(compute_dtype)
    ).astype(out_ref.dtype)


# ---------------------------------------------------------------------------
# Wrapper
# ---------------------------------------------------------------------------
def positional_embedding(ids, word_table, pos_table, *,
                         max_tq=None, force_hbm_gather=False):
    """ids: (seq,) int; word_table: (vocab, E); pos_table: (max_seq, E).

    Returns (seq, E) = word_table[ids] + pos_table[:seq].
    """
    seq = int(ids.shape[0])
    vocab, emb = int(word_table.shape[0]), int(word_table.shape[1])
    max_seq = int(pos_table.shape[0])
    assert pos_table.shape[1] == emb
    assert 1 <= seq <= max_seq

    out_dtype = jnp.result_type(word_table.dtype, pos_table.dtype)
    itemsize = jnp.dtype(word_table.dtype).itemsize
    table_bytes = vocab * emb * itemsize

    tile_budget, tq_cap, vmem_cap = _vmem_budgets()

    def clamp_tq(tq):
        if max_tq is not None:
            tq = min(tq, max(8, (int(max_tq) // 8) * 8))
        return tq

    # ---- fast path: small vocab -> table resident in VMEM, no row DMAs -----
    use_vmem_table = (
        not force_hbm_gather
        and vocab <= 2048
        and table_bytes <= min(8 << 20, tile_budget // 2)
    )

    if use_vmem_table:
        per_row = 4 * emb * itemsize + vocab * itemsize + 4 * emb
        tq = clamp_tq(_choose_tq(seq, per_row, tile_budget - table_bytes, tq_cap))
        ids2d = ids.astype(jnp.int32).reshape(seq, 1)
        tile_bytes = tq * emb * itemsize
        vmem_limit = int(min(vmem_cap,
                             max(32 << 20, 2 * table_bytes + 10 * tile_bytes)))
        return pl.pallas_call(
            _pos_emb_vmem_kernel,
            out_shape=jax.ShapeDtypeStruct((seq, emb), out_dtype),
            grid_spec=pltpu.PrefetchScalarGridSpec(
                num_scalar_prefetch=0,
                grid=(pl.cdiv(seq, tq),),
                in_specs=[
                    pl.BlockSpec((tq, 1), lambda i: (i, 0)),        # ids tile
                    pl.BlockSpec((vocab, emb), lambda i: (0, 0)),   # resident table
                    pl.BlockSpec((tq, emb), lambda i: (i, 0)),      # pos tile
                ],
                out_specs=pl.BlockSpec((tq, emb), lambda i: (i, 0)),
            ),
            compiler_params=pltpu.CompilerParams(
                dimension_semantics=("parallel",),   # disjoint output tiles
                vmem_limit_bytes=vmem_limit,
            ),
        )(ids2d, word_table, pos_table)

    # ---- fallback: table in HBM, double-buffered per-row DMA gather --------
    per_row = 6 * emb * itemsize          # pos(x2) + out(x2) + gather(x2)
    tq = clamp_tq(_choose_tq(seq, per_row, tile_budget, tq_cap))
    num_tiles = pl.cdiv(seq, tq)
    padded_seq = num_tiles * tq
    # Only the tiny 1-D id vector is padded/clamped on the host; the big
    # (seq, E) pos/out slabs are untouched (ragged tail handled by the
    # pipeline's partial-block masking) -- no extra full-slab HBM round trips.
    ids_p = jnp.pad(jnp.clip(ids.astype(jnp.int32), 0, vocab - 1),
                    (0, padded_seq - seq))
    # NOTE: for very long sequences one would tile ids per-step instead of
    # scalar-prefetching the whole vector into SMEM.
    compute_dtype = jnp.bfloat16 if out_dtype == jnp.bfloat16 else jnp.float32
    tile_bytes = tq * emb * itemsize
    vmem_limit = int(min(vmem_cap, max(32 << 20, 12 * tile_bytes)))
    return pl.pallas_call(
        functools.partial(_pos_emb_dma_kernel, tq=tq, compute_dtype=compute_dtype),
        out_shape=jax.ShapeDtypeStruct((seq, emb), out_dtype),
        grid_spec=pltpu.PrefetchScalarGridSpec(
            num_scalar_prefetch=1,                      # ids -> SMEM
            grid=(num_tiles,),
            in_specs=[
                pl.BlockSpec(memory_space=pl.ANY),                    # word table (HBM)
                pl.BlockSpec((tq, emb), lambda i, ids_ref: (i, 0)),   # pos tile
            ],
            out_specs=pl.BlockSpec((tq, emb), lambda i, ids_ref: (i, 0)),
            scratch_shapes=[
                pltpu.VMEM((2, tq, emb), word_table.dtype),   # gather, 2 slots
                pltpu.SemaphoreType.DMA((2,)),                # per-slot DMA sems
            ],
        ),
        compiler_params=pltpu.CompilerParams(
            # Cross-step DMA prefetch carries state -> keep the axis sequential.
            dimension_semantics=("arbitrary",),
            vmem_limit_bytes=vmem_limit,
        ),
    )(ids_p, word_table, pos_table)


# ---------------------------------------------------------------------------
# Self-test
# ---------------------------------------------------------------------------
if __name__ == "__main__":
    key = jax.random.PRNGKey(0)

    # Test 1: module-sized config -> VMEM-resident fast path, exact tiling.
    vocab, emb, max_seq, seq = 64, 128, 16, 8
    k1, k2, k3, key = jax.random.split(key, 4)
    word = jax.random.normal(k1, (vocab, emb), dtype=jnp.float32)
    pos = jax.random.normal(k2, (max_seq, emb), dtype=jnp.float32)
    x = jax.random.randint(k3, (seq,), 0, vocab, dtype=jnp.int32)
    out = jax.block_until_ready(positional_embedding(x, word, pos))
    ref = word[x] + pos[:seq]
    assert out.shape == (seq, emb) and out.dtype == jnp.float32
    assert jnp.allclose(out, ref, atol=1e-5), "fast path mismatch"

    # Test 2: forced HBM-gather fallback, multi-tile + ragged tail, exercises
    # the double-buffered prefetch and the single aggregated wait.
    vocab, emb, max_seq, seq = 64, 128, 64, 40
    k1, k2, k3, key = jax.random.split(key, 4)
    word = jax.random.normal(k1, (vocab, emb), dtype=jnp.float32)
    pos = jax.random.normal(k2, (max_seq, emb), dtype=jnp.float32)
    x = jax.random.randint(k3, (seq,), 0, vocab, dtype=jnp.int32)
    out = jax.block_until_ready(
        positional_embedding(x, word, pos, max_tq=16, force_hbm_gather=True))
    ref = word[x] + pos[:seq]
    assert out.shape == (seq, emb)
    assert jnp.allclose(out, ref, atol=1e-5), "HBM-gather path mismatch"

    # Test 3: fast path with a ragged tail (seq not a multiple of the tile).
    vocab, emb, max_seq, seq = 100, 256, 16, 12
    k1, k2, k3, key = jax.random.split(key, 4)
    word = jax.random.normal(k1, (vocab, emb), dtype=jnp.float32)
    pos = jax.random.normal(k2, (max_seq, emb), dtype=jnp.float32)
    x = jax.random.randint(k3, (seq,), 0, vocab, dtype=jnp.int32)
    out = jax.block_until_ready(positional_embedding(x, word, pos))
    ref = word[x] + pos[:seq]
    assert out.shape == (seq, emb)
    assert jnp.allclose(out, ref, atol=1e-5), "ragged fast path mismatch"

    print("KERNEL_OK")
</pallas_src>

<mosaic_0001>
module attributes {stable_mosaic.version = 11 : i64} {
  func.func @_pos_emb_vmem_kernel(%arg0: i32, %arg1: memref<8x1xi32, #tpu.memory_space<vmem>>, %arg2: memref<64x128xf32, #tpu.memory_space<vmem>>, %arg3: memref<8x128xf32, #tpu.memory_space<vmem>>, %arg4: memref<8x128xf32, #tpu.memory_space<vmem>>) attributes {dimension_semantics = [#tpu.dimension_semantics<parallel>], iteration_bounds = array<i64: 1>, scalar_prefetch = 0 : i64, scratch_operands = 0 : i64, tpu.core_type = #tpu.core_type<tc>, window_params = [{transform_indices = @transform_0, window_bounds = array<i64: 8, 1>}, {pipeline_mode = #tpu.pipeline_mode<synchronous>, transform_indices = @transform_1, window_bounds = array<i64: 64, 128>}, {transform_indices = @transform_2, window_bounds = array<i64: 8, 128>}, {transform_indices = @transform_3, window_bounds = array<i64: 8, 128>}]} {
    %c0 = arith.constant 0 : index
    %c0_0 = arith.constant 0 : index
    %0 = vector.load %arg1[%c0, %c0_0] : memref<8x1xi32, #tpu.memory_space<vmem>>, vector<8x1xi32>
    %c0_i32 = arith.constant 0 : i32
    %c63_i32 = arith.constant 63 : i32
    %1 = vector.broadcast %c0_i32 : i32 to vector<8x1xi32>
    %2 = arith.maxsi %1, %0 : vector<8x1xi32>
    %3 = vector.broadcast %c63_i32 : i32 to vector<8x1xi32>
    %4 = arith.minsi %3, %2 : vector<8x1xi32>
    %5 = tpu.iota {dimensions = array<i32: 1>} : vector<8x64xi32>
    %6 = vector.broadcast %4 : vector<8x1xi32> to vector<8x64xi32>
    %7 = arith.cmpi eq, %6, %5 : vector<8x64xi32>
    %8 = arith.extui %7 : vector<8x64xi1> to vector<8x64xi32>
    %9 = arith.sitofp %8 : vector<8x64xi32> to vector<8x64xf32>
    %c0_1 = arith.constant 0 : index
    %c0_2 = arith.constant 0 : index
    %10 = vector.load %arg2[%c0_1, %c0_2] : memref<64x128xf32, #tpu.memory_space<vmem>>, vector<64x128xf32>
    %cst = arith.constant dense<0.000000e+00> : vector<8x128xf32>
    %11 = tpu.matmul %9, %10, %cst {dimension_numbers = #tpu.dot_dimension_numbers<[1], [0], [0], [1], [0, 0, 1, 1], [], []>} : vector<8x64xf32>, vector<64x128xf32>, vector<8x128xf32> -> vector<8x128xf32>
    %c0_3 = arith.constant 0 : index
    %c0_4 = arith.constant 0 : index
    %12 = vector.load %arg3[%c0_3, %c0_4] : memref<8x128xf32, #tpu.memory_space<vmem>>, vector<8x128xf32>
    %13 = arith.addf %11, %12 : vector<8x128xf32>
    %c0_5 = arith.constant 0 : index
    %c0_6 = arith.constant 0 : index
    %14 = vector.load %arg4[%c0_5, %c0_6] : memref<8x128xf32, #tpu.memory_space<vmem>>, vector<8x128xf32>
    tpu.vector_store %arg4[%c0_5, %c0_6], %13 {strides = array<i32>} : memref<8x128xf32, #tpu.memory_space<vmem>>, vector<8x128xf32>,
    return
  }
  func.func @transform_0(%arg0: i32) -> (i32, i32) {
    %c0_i32 = arith.constant 0 : i32
    %c0_i32_0 = arith.constant 0 : i32
    return %arg0, %c0_i32 : i32, i32
  }
  func.func @transform_1(%arg0: i32) -> (i32, i32) {
    %c0_i32 = arith.constant 0 : i32
    %c0_i32_0 = arith.constant 0 : i32
    %c0_i32_1 = arith.constant 0 : i32
    return %c0_i32, %c0_i32_0 : i32, i32
  }
  func.func @transform_2(%arg0: i32) -> (i32, i32) {
    %c0_i32 = arith.constant 0 : i32
    %c0_i32_0 = arith.constant 0 : i32
    return %arg0, %c0_i32 : i32, i32
  }
  func.func @transform_3(%arg0: i32) -> (i32, i32) {
    %c0_i32 = arith.constant 0 : i32
    %c0_i32_0 = arith.constant 0 : i32
    return %arg0, %c0_i32 : i32, i32
  }
}

</mosaic_0001>

<llo_original>
// kernel: tpu_custom_call.1
$region0: #{tpu_custom_call.1}
  #allocation0 [shape = 'u32[]', space=smem, size = 0x4, offset = 0x4, fixed_abs, tag = 'smem constant byte address 0x4 - core index']
  #allocation1 [shape = 'u32[144,128]{1,0:T(1,128)}', space=vmem, size = 0x12000, scoped, tag = 'internal scratch']
  %s0 = inlined_call_operand.vmem [shape: s32[8,1], index: 0, kind: input, shape index: {}]
  %s1 = inlined_call_operand.hbm [shape: f32[64,128], index: 1, kind: input, shape index: {}]
  %s2 = inlined_call_operand.hbm [shape: f32[16,128], index: 2, kind: input, shape index: {}]
  %s3 = inlined_call_operand.hbm [shape: f32[8,128], index: 3, kind: output, shape index: {}]
  %s4 = sld [smem:[#allocation0]]
  $region30: #{tpu_custom_call.1} parent=0
    _
  %s6 = ssub.s32 1, %s4
  %s7 = scalar_select 0, %s6, %s4
  $region1: #{tpu_custom_call.1} parent=0
    #allocation2 [shape = 'u8[32768]{0}', space=vmem, size = 0x8000, scoped, tag = 'input window, operand 1, single buffered']
    #allocation3 [shape = 's32[1]{0}', space=sflag, size = 0x4, scoped, tag = 'scoped memory for tpu_custom_call.1']
    #allocation4 [shape = 's32[1]{0}', space=sflag, size = 0x4, scoped, tag = 'scoped memory for tpu_custom_call.1']
    #allocation5 [shape = 'u8[4096]{0}', space=vmem, size = 0x1000, scoped, tag = 'input window, operand 2, single buffered']
    #allocation6 [shape = 's32[1]{0}', space=sflag, size = 0x4, scoped, tag = 'scoped memory for tpu_custom_call.1']
    #allocation7 [shape = 'u8[4096]{0}', space=vmem, size = 0x1000, scoped, tag = 'output window, operand 0, single buffered']
    %8 = vsyncpa [#allocation3], 0
    %9 = vsyncpa [#allocation6], 0
    %10 = vsyncpa [#allocation4], 0
    // Predicated region
    $region2: #{tpu_custom_call.1} parent=1 // pred_check
      _
    $region3: #{tpu_custom_call.1} parent=1 // pred_check_branch
      %12 = sbr.rel (0) target = $region5
    $region4: #{tpu_custom_call.1} parent=1 // pred_region
      _
    $region5: #{tpu_custom_call.1} parent=1 // pred_fallthru
      _
    // Predicated region
    $region6: #{tpu_custom_call.1} parent=1 // pred_check
      _
    $region7: #{tpu_custom_call.1} parent=1 // pred_check_branch
      %14 = sbr.rel (0) target = $region9
    $region8: #{tpu_custom_call.1} parent=1 // pred_region
      %s16 = ssub.s32 1024, 1024
      %17 = vsyncadd [#allocation3], %s16
      %s18 = sshll.u32 [#allocation2], 4
      %s19 = int_to_ptr.vmem [resolvable:$true] %s18
      %24 = dma.hbm_to_vmem [thread:$0]  %s1, 1024, %s19, [#allocation3], 128, 128, 8
    $region9: #{tpu_custom_call.1} parent=1 // pred_fallthru
      _
    // Predicated region
    $region10: #{tpu_custom_call.1} parent=1 // pred_check
      _
    $region11: #{tpu_custom_call.1} parent=1 // pred_check_branch
      %26 = sbr.rel (0) target = $region13
    $region12: #{tpu_custom_call.1} parent=1 // pred_region
      %s28 = ssub.s32 128, 128
      %29 = vsyncadd [#allocation6], %s28
      %s31 = sshll.u32 [#allocation5], 4
      %s32 = int_to_ptr.vmem [resolvable:$true] %s31
      %34 = dma.hbm_to_vmem [thread:$0]  %s2, 128, %s32, [#allocation6]
    $region13: #{tpu_custom_call.1} parent=1 // pred_fallthru
      _
    // Predicated region
    $region14: #{tpu_custom_call.1} parent=1 // pred_check
      _
    $region15: #{tpu_custom_call.1} parent=1 // pred_check_branch
      %36 = sbr.rel (0) target = $region17
    $region16: #{tpu_custom_call.1} parent=1 // pred_region
      %37 = dma.done [#allocation3], 1024
    $region17: #{tpu_custom_call.1} parent=1 // pred_fallthru
      _
    // Predicated region
    $region18: #{tpu_custom_call.1} parent=1 // pred_check
      _
    $region19: #{tpu_custom_call.1} parent=1 // pred_check_branch
      %39 = sbr.rel (0) target = $region21
    $region20: #{tpu_custom_call.1} parent=1 // pred_region
      %40 = dma.done [#allocation6], 128
    $region21: #{tpu_custom_call.1} parent=1 // pred_fallthru
      _
    %v41 = vld [vmem:[%s0] sm:$0xff]
    %vm42 = vcmp.gt.s32.totalorder %v41, 0
    %v43 = vsel %vm42, %v41, 0
    %vm44 = vcmp.lt.s32.totalorder %v43, 63
    %v45 = vsel %vm44, %v43, 63
    %v46 = vlaneseq
    %v47 = vand.u32 %v46, 127
    %48 = vset.pattern.permute.xlu0 0
    %49 = vperm.xlu0 %48, %v45
    %v50 = vpop.permute.xlu0 %49
    %vm51 = vcmp.eq.s32.totalorder %v50, %v47
    %v52 = vsel %vm51, 1, 0
    %v53 = vcvt.s32.f32 %v52
    %v54 = vld [vmem:[#allocation2] sm:$0xff]
    %v55 = vld [vmem:[#allocation2 + $0x8] sm:$0xff]
    %v56 = vld [vmem:[#allocation2 + $0x10] sm:$0xff]
    %v57 = vld [vmem:[#allocation2 + $0x18] sm:$0xff]
    %v58 = vld [vmem:[#allocation2 + $0x20] sm:$0xff]
    %v59 = vld [vmem:[#allocation2 + $0x28] sm:$0xff]
    %v60 = vld [vmem:[#allocation2 + $0x30] sm:$0xff]
    %v61 = vld [vmem:[#allocation2 + $0x38] sm:$0xff]
    %v62 = vld [vmem:[#allocation5] sm:$0xff]
    %vm63 = vcmask 523264
    %v65 = vsel %vm63, %v53, 0
    %67 = vmatprep.subr.mxu0 0.0
    %68 = vmatpush1.msra.mxu0 0.0
    %69 = vmatprep.subr.mxu0 0.0
    %70 = vmatpush1.msra.mxu0 0.0
    %71 = vmatprep.subr.mxu0 0.0
    %72 = vmatpush1.msra.mxu0 0.0
    %73 = vmatprep.subr.mxu0 0.0
    %74 = vmatpush1.msra.mxu0 0.0
    %75 = vmatprep.subr.mxu0 0.0
    %76 = vmatpush1.msra.mxu0 0.0
    %77 = vmatprep.subr.mxu0 0.0
    %78 = vmatpush1.msra.mxu0 0.0
    %79 = vmatprep.subr.mxu0 0.0
    %80 = vmatpush1.msra.mxu0 0.0
    %81 = vmatprep.subr.mxu0 0.0
    %82 = vmatpush1.msra.mxu0 0.0
    %83 = vmatprep.subr.mxu0 0.0
    %84 = vmatpush1.msra.mxu0 %v61
    %85 = vmatprep.subr.mxu0 0.0
    %86 = vmatpush1.msra.mxu0 %v60
    %87 = vmatprep.subr.mxu0 0.0
    %88 = vmatpush1.msra.mxu0 %v59
    %89 = vmatprep.subr.mxu0 0.0
    %90 = vmatpush1.msra.mxu0 %v58
    %91 = vmatprep.subr.mxu0 0.0
    %92 = vmatpush1.msra.mxu0 %v57
    %93 = vmatprep.subr.mxu0 0.0
    %94 = vmatpush1.msra.mxu0 %v56
    %95 = vmatprep.subr.mxu0 0.0
    %96 = vmatpush1.msra.mxu0 %v55
    %97 = vmatprep.subr.mxu0 0.0
    %98 = vmatpush1.msra.mxu0 %v54
    %99 = vmatprep.subr.mxu0 0.0
    %100 = vmatpush2.msra.mxu0 0.0
    %101 = vmatprep.subr.mxu0 0.0
    %102 = vmatpush2.msra.mxu0 0.0
    %103 = vmatprep.subr.mxu0 0.0
    %104 = vmatpush2.msra.mxu0 0.0
    %105 = vmatprep.subr.mxu0 0.0
    %106 = vmatpush2.msra.mxu0 0.0
    %107 = vmatprep.subr.mxu0 0.0
    %108 = vmatpush2.msra.mxu0 0.0
    %109 = vmatprep.subr.mxu0 0.0
    %110 = vmatpush2.msra.mxu0 0.0
    %111 = vmatprep.subr.mxu0 0.0
    %112 = vmatpush2.msra.mxu0 0.0
    %113 = vmatprep.subr.mxu0 0.0
    %114 = vmatpush2.msra.mxu0 0.0
    %115 = vmatprep.subr.mxu0 0.0
    %116 = vmatpush2.msra.mxu0 0.0
    %117 = vmatprep.subr.mxu0 0.0
    %118 = vmatpush2.msra.mxu0 0.0
    %119 = vmatprep.subr.mxu0 0.0
    %120 = vmatpush2.msra.mxu0 0.0
    %121 = vmatprep.subr.mxu0 0.0
    %122 = vmatpush2.msra.mxu0 0.0
    %123 = vmatprep.subr.mxu0 0.0
    %124 = vmatpush2.msra.mxu0 0.0
    %125 = vmatprep.subr.mxu0 0.0
    %126 = vmatpush2.msra.mxu0 0.0
    %127 = vmatprep.subr.mxu0 0.0
    %128 = vmatpush2.msra.mxu0 0.0
    %129 = vmatprep.subr.mxu0 0.0
    %130 = vmatpush2.msra.mxu0 0.0
    %131 = vmatprep.mubr.f32.mxu0 0.0
    %132 = vmatmul.mubr.f32.gmra.mxu0 %v65
    %v133 = vpop.f32.mrf.mxu0
    %v134 = vadd.f32 %v62, %v133
    %v135 = vpop.f32.mrf.mxu0
    %136 = vdwg.mxu0
    %137 = vst [vmem:[#allocation7] sm:$0xff] %v134
    // Predicated region
    $region22: #{tpu_custom_call.1} parent=1 // pred_check
      _
    $region23: #{tpu_custom_call.1} parent=1 // pred_check_branch
      %139 = sbr.rel (0) target = $region25
    $region24: #{tpu_custom_call.1} parent=1 // pred_region
      %s141 = ssub.s32 128, 128
      %142 = vsyncadd [#allocation4], %s141
      %s144 = sshll.u32 [#allocation7], 4
      %s145 = int_to_ptr.vmem [resolvable:$true] %s144
      %147 = dma.vmem_to_hbm [thread:$0]  %s145, 128, %s3, [#allocation4]
    $region25: #{tpu_custom_call.1} parent=1 // pred_fallthru
      _
    // Predicated region
    $region26: #{tpu_custom_call.1} parent=1 // pred_check
      _
    $region27: #{tpu_custom_call.1} parent=1 // pred_check_branch
      %149 = sbr.rel (0) target = $region29
    $region28: #{tpu_custom_call.1} parent=1 // pred_region
      %150 = dma.done [#allocation4], 128
    $region29: #{tpu_custom_call.1} parent=1 // pred_fallthru
      _
    %151 = vsyncpa [#allocation3], 1
    %152 = vsyncpa [#allocation6], 1
    %153 = vsyncpa [#allocation4], 1

</llo_original>
